<compile_context>
chip_gen: v5e
topology: v5e:2x2
jax: 0.10.0
libtpu: 0.0.40
codegen_flags: <defaults>
</compile_context>

<pallas_src>
import numpy as np

import jax
import jax.numpy as jnp
from jax.experimental import pallas as pl
from jax.experimental.pallas import tpu as pltpu


# ---------------------------------------------------------------------------
# Static geometry (fixed by the module: 28x28 single-channel input)
# ---------------------------------------------------------------------------

_H0 = 28
_CONVS = ((5, 1, 3), (6, 5, 4), (7, 6, 3))     # (cout, cin, k) per conv layer
_FILLS = (0.1, 0.2, 0.3)
_NCLS = 10


def _derive_geometry():
    layers = []
    h = _H0
    for (cout, cin, k) in _CONVS:
        ho = h - k + 1          # valid-conv output spatial (square)
        hp = ho // 2            # 2x2/stride-2 floor-mode pooled spatial
        layers.append(dict(cout=cout, cin=cin, k=k, hin=h, ho=ho, hp=hp))
        h = hp
    return layers


_GEOM = _derive_geometry()      # 28->26->13, 13->10->5, 5->3->1


def _block_table():
    """Names + 2D shapes of every constant block in the packed weight slab."""
    blocks = []
    for l, g in enumerate(_GEOM):
        if l == 0:
            kdim = g["hin"] * g["cin"]                      # 28
        else:
            gp = _GEOM[l - 1]
            kdim = (gp["ho"] - 1) * gp["cout"]              # un-subsampled lanes
        ndim = g["ho"] * g["cout"]
        for i in range(g["k"]):
            blocks.append((f"w{l}_{i}", (kdim, ndim)))      # banded+folded taps
        if l < len(_GEOM) - 1:
            blocks.append((f"sh{l}", (g["hp"], g["ho"] - 1)))   # pool row selector
    gl = _GEOM[-1]
    blocks.append(("fcw", ((gl["ho"] - 1) * gl["cout"], _NCLS)))  # sw3 @ fc.W^T
    return blocks


def _alloc(blocks):
    """Assign 16-row-aligned offsets in one lane-dense slab (bf16-tile safe)."""
    off, rows, width = {}, 0, 0
    for name, (r, c) in blocks:
        off[name] = rows
        rows += -(-r // 16) * 16
        width = max(width, c)
    return off, rows, width


_WBLOCKS = _block_table()
_WSHAPE = dict(_WBLOCKS)
_WOFF, _WROWS, _WWIDTH = _alloc(_WBLOCKS)       # (848 rows, width 130)


# ---------------------------------------------------------------------------
# One-time wrapper-side packing (hoisted out of the per-call path)
# ---------------------------------------------------------------------------

def _banded_taps(w, hin):
    """Per-kernel-row banded weights B[i] (hin*cin, wo*cout) such that the
    contribution of kernel row i on a channels-last (hin, hin*cin) slab `a`
    is exactly `a[i:i+ho, :] @ B[i]` (kw taps folded along K)."""
    w = np.asarray(w, np.float32)
    cout, cin, kh, kw = w.shape
    wo = hin - kw + 1
    B = np.zeros((kh, hin * cin, wo * cout), np.float32)
    for i in range(kh):
        for j in range(kw):
            tap = w[:, :, i, j].T                           # (cin, cout)
            for x in range(wo):
                B[i, (x + j) * cin:(x + j + 1) * cin,
                      x * cout:(x + 1) * cout] = tap
    return B


def _pool_selectors(ho, c):
    """0/1 selectors for a floor-mode 2x2/stride-2 max pool of a (ho, ho*c)
    channels-last slab: sh (hp, ho-1) row subsample, sw ((ho-1)*c, hp*c) lane
    subsample (the latter gets folded into the next layer's weights)."""
    hp = ho // 2
    sh = np.zeros((hp, ho - 1), np.float32)
    sh[np.arange(hp), 2 * np.arange(hp)] = 1.0
    sw = np.zeros(((ho - 1) * c, hp * c), np.float32)
    rows = (2 * np.arange(hp)[:, None] * c + np.arange(c)[None, :]).reshape(-1)
    sw[rows, np.arange(hp * c)] = 1.0
    return sh, sw


def prepare_params(params):
    """Pack every constant into two lane-dense slabs:
       - bf16 slab: banded conv weights (with the previous pool's lane
         subsample folded in), pool row selectors, folded FC weight
       - f32 slab: per-layer bias rows + fc bias
    Called once at init time (not per forward)."""
    wslab = np.zeros((_WROWS, _WWIDTH), np.float32)
    bslab = np.zeros((len(_GEOM) + 1, _WWIDTH), np.float32)

    def put(name, mat):
        r0, (rows, cols) = _WOFF[name], _WSHAPE[name]
        assert mat.shape == (rows, cols), (name, mat.shape, (rows, cols))
        wslab[r0:r0 + rows, :cols] = mat

    sw_fold = None                      # previous pool's lane-subsample selector
    for l, (g, key) in enumerate(zip(_GEOM, ("conv1", "conv2", "conv3"))):
        w, b = params[key]
        B = _banded_taps(w, g["hin"])                       # (k, hin*cin, ho*cout)
        if sw_fold is not None:
            B = np.einsum("pq,kqn->kpn", sw_fold, B)        # fold pool subsample
        for i in range(g["k"]):
            put(f"w{l}_{i}", B[i])
        bslab[l, :g["ho"] * g["cout"]] = np.tile(np.asarray(b, np.float32), g["ho"])
        sh, sw_fold = _pool_selectors(g["ho"], g["cout"])
        if l < len(_GEOM) - 1:
            put(f"sh{l}", sh)           # last pool's row select is a plain slice

    fw, fb = params["fc1"]
    put("fcw", sw_fold @ np.asarray(fw, np.float32).T)      # (14, 10)
    bslab[len(_GEOM), :_NCLS] = np.asarray(fb, np.float32)

    return (jnp.asarray(wslab, jnp.bfloat16), jnp.asarray(bslab, jnp.float32))


# ---------------------------------------------------------------------------
# Fused forward kernel (single invocation, no grid -- everything fits in VMEM)
# ---------------------------------------------------------------------------

def _convnet_kernel(x_ref, w_ref, b_ref, o_ref):
    n = o_ref.shape[0]

    def wblk(name):                     # static view into the packed bf16 slab
        r0, (rows, cols) = _WOFF[name], _WSHAPE[name]
        return w_ref[r0:r0 + rows, 0:cols]

    # Only sample 0 feeds the output (the module repeats feature row 0), so the
    # conv/pool pipeline runs exactly once.
    a = x_ref[0]                                            # (28, 28), cin = 1
    for l, g in enumerate(_GEOM):
        ho, cout, k = g["ho"], g["cout"], g["k"]

        # Module's constant fill (keeps the `c + a - a` data dependence on x).
        a = jnp.ones_like(a) * _FILLS[l] + a - a

        # Conv + bias + ReLU: k banded MXU matmuls on contiguous row slabs,
        # bf16 operands / f32 accumulation.
        acc = jnp.dot(a[0:ho, :].astype(jnp.bfloat16), wblk(f"w{l}_0"),
                      preferred_element_type=jnp.float32)
        for i in range(1, k):
            acc = acc + jnp.dot(a[i:i + ho, :].astype(jnp.bfloat16),
                                wblk(f"w{l}_{i}"),
                                preferred_element_type=jnp.float32)
        y = jnp.maximum(acc + b_ref[l:l + 1, 0:ho * cout], 0.0)     # (ho, ho*cout)

        # 2x2 / stride-2 max pool (floor mode): adjacent maxima on contiguous
        # slices; the stride-2 row subsample is a 0/1 selection matmul, the
        # lane subsample is already folded into the next layer's weights.
        mv = jnp.maximum(y[0:ho - 1, :], y[1:ho, :])
        mh = jnp.maximum(mv[:, 0:(ho - 1) * cout], mv[:, cout:ho * cout])
        if l + 1 < len(_GEOM):
            a = jnp.dot(wblk(f"sh{l}"), mh.astype(jnp.bfloat16),
                        preferred_element_type=jnp.float32)  # (hp, (ho-1)*cout)
        else:
            a = mh[0:1, :]                                   # hp == 1: keep row 0

    # fc1 (last pool's lane subsample folded into the weight) + log_softmax.
    logits = (jnp.dot(a.astype(jnp.bfloat16), wblk("fcw"),
                      preferred_element_type=jnp.float32)
              + b_ref[len(_GEOM):len(_GEOM) + 1, 0:_NCLS])   # (1, 10)
    z = logits - jnp.max(logits, axis=-1, keepdims=True)
    logp = z - jnp.log(jnp.sum(jnp.exp(z), axis=-1, keepdims=True))

    # x = x[0, :].repeat(N, 1): broadcast the single row across the batch.
    o_ref[...] = (logp + jnp.zeros((n, _NCLS), jnp.float32)).astype(o_ref.dtype)


def convnet_forward(packed, x):
    """packed = prepare_params(params); x: (N, 1, 28, 28)."""
    wslab, bslab = packed
    n = x.shape[0]
    x2 = x.reshape(n, _H0, _H0).astype(jnp.float32)
    vmem = pl.BlockSpec(memory_space=pltpu.MemorySpace.VMEM)
    return pl.pallas_call(
        _convnet_kernel,
        out_shape=jax.ShapeDtypeStruct((n, _NCLS), jnp.float32),
        in_specs=[vmem, vmem, vmem],
        out_specs=vmem,
    )(x2, wslab, bslab)


# ---------------------------------------------------------------------------
# Pure-JAX reference of the module (for correctness check only)
# ---------------------------------------------------------------------------

def convnet_reference(params, x):
    def conv(x, w, b):
        y = jax.lax.conv_general_dilated(
            x, w, (1, 1), "VALID", dimension_numbers=("NCHW", "OIHW", "NCHW"))
        return y + b.reshape(1, -1, 1, 1)

    def pool(x):
        return jax.lax.reduce_window(
            x, -jnp.inf, jax.lax.max, (1, 1, 2, 2), (1, 1, 2, 2), "VALID")

    x = jnp.ones_like(x) * 0.1 + x - x
    x = pool(jax.nn.relu(conv(x, *params["conv1"])))
    x = jnp.ones_like(x) * 0.2 + x - x
    x = pool(jax.nn.relu(conv(x, *params["conv2"])))
    x = jnp.ones_like(x) * 0.3 + x - x
    x = pool(jax.nn.relu(conv(x, *params["conv3"])))
    n = x.shape[0]
    x = x.reshape(n, 7)
    x = jnp.tile(x[0:1, :], (n, 1))
    fw, fb = params["fc1"]
    return jax.nn.log_softmax(x @ fw.T + fb, axis=1)


# ---------------------------------------------------------------------------
# Parameters (deterministic, PyTorch-default-style uniform init)
# ---------------------------------------------------------------------------

def init_params(key):
    def conv_init(k, cout, cin, ks):
        k1, k2 = jax.random.split(k)
        bound = 1.0 / jnp.sqrt(jnp.float32(cin * ks * ks))
        w = jax.random.uniform(k1, (cout, cin, ks, ks), jnp.float32, -bound, bound)
        b = jax.random.uniform(k2, (cout,), jnp.float32, -bound, bound)
        return w, b

    def linear_init(k, out_f, in_f):
        k1, k2 = jax.random.split(k)
        bound = 1.0 / jnp.sqrt(jnp.float32(in_f))
        w = jax.random.uniform(k1, (out_f, in_f), jnp.float32, -bound, bound)
        b = jax.random.uniform(k2, (out_f,), jnp.float32, -bound, bound)
        return w, b

    k1, k2, k3, k4 = jax.random.split(key, 4)
    return {
        "conv1": conv_init(k1, 5, 1, 3),
        "conv2": conv_init(k2, 6, 5, 4),
        "conv3": conv_init(k3, 7, 6, 3),
        "fc1": linear_init(k4, 10, 7),
    }


if __name__ == "__main__":
    key = jax.random.PRNGKey(0)
    k_params, k_x = jax.random.split(key)
    params = init_params(k_params)
    packed = prepare_params(params)       # one-time weight packing (hoisted)

    # MNIST-shaped input implied by the module (28x28 -> ... -> 1x1x7), batch=2.
    x = jax.random.normal(k_x, (2, 1, 28, 28), dtype=jnp.float32)

    out = jax.block_until_ready(jax.jit(convnet_forward)(packed, x))
    ref = jax.block_until_ready(jax.jit(convnet_reference)(params, x))

    assert out.shape == (2, 10)
    assert bool(jnp.all(jnp.isfinite(out)))
    # rows of log_softmax must each sum (in prob space) to ~1
    assert bool(jnp.allclose(jnp.sum(jnp.exp(out), axis=1), 1.0, atol=1e-5))
    # match the pure-JAX reference of the module (bf16 matmul operands are well
    # inside this tolerance because every layer's input is a constant fill)
    assert bool(jnp.allclose(out, ref, atol=2e-2)), (out, ref)

    print("KERNEL_OK")
</pallas_src>

<mosaic_0001>
module attributes {stable_mosaic.version = 11 : i64} {
  func.func @_convnet_kernel(%arg0: memref<2x28x28xf32, #tpu.memory_space<vmem>>, %arg1: memref<848x130xbf16, #tpu.memory_space<vmem>>, %arg2: memref<4x130xf32, #tpu.memory_space<vmem>>, %arg3: memref<2x10xf32, #tpu.memory_space<vmem>>) attributes {dimension_semantics = [], scalar_prefetch = 0 : i64, scratch_operands = 0 : i64, tpu.core_type = #tpu.core_type<tc>} {
    %c0 = arith.constant 0 : index
    %c0_0 = arith.constant 0 : index
    %c0_1 = arith.constant 0 : index
    %0 = vector.load %arg0[%c0, %c0_0, %c0_1] : memref<2x28x28xf32, #tpu.memory_space<vmem>>, vector<1x28x28xf32>
    %1 = vector.shape_cast %0 : vector<1x28x28xf32> to vector<28x28xf32>
    %cst = arith.constant 1.000000e+00 : f32
    %2 = vector.broadcast %cst : f32 to vector<28x28xf32>
    %cst_2 = arith.constant 1.000000e-01 : f32
    %3 = vector.broadcast %cst_2 : f32 to vector<28x28xf32>
    %4 = arith.mulf %2, %3 : vector<28x28xf32>
    %5 = arith.addf %4, %1 : vector<28x28xf32>
    %6 = arith.subf %5, %1 : vector<28x28xf32>
    %7 = vector.extract_strided_slice %6 {offsets = [0, 0], sizes = [26, 28], strides = [1, 1]} : vector<28x28xf32> to vector<26x28xf32>
    %8 = arith.truncf %7 : vector<26x28xf32> to vector<26x28xbf16>
    %c0_3 = arith.constant 0 : index
    %c0_4 = arith.constant 0 : index
    %9 = vector.load %arg1[%c0_3, %c0_4] : memref<848x130xbf16, #tpu.memory_space<vmem>>, vector<28x130xbf16>
    %cst_5 = arith.constant dense<0.000000e+00> : vector<26x130xf32>
    %10 = tpu.matmul %8, %9, %cst_5 {dimension_numbers = #tpu.dot_dimension_numbers<[1], [0], [0], [1], [0, 0, 1, 1], [], []>} : vector<26x28xbf16>, vector<28x130xbf16>, vector<26x130xf32> -> vector<26x130xf32>
    %11 = vector.extract_strided_slice %6 {offsets = [1, 0], sizes = [26, 28], strides = [1, 1]} : vector<28x28xf32> to vector<26x28xf32>
    %12 = arith.truncf %11 : vector<26x28xf32> to vector<26x28xbf16>
    %c32 = arith.constant 32 : index
    %c0_6 = arith.constant 0 : index
    %13 = vector.load %arg1[%c32, %c0_6] : memref<848x130xbf16, #tpu.memory_space<vmem>>, vector<28x130xbf16>
    %cst_7 = arith.constant dense<0.000000e+00> : vector<26x130xf32>
    %14 = tpu.matmul %12, %13, %cst_7 {dimension_numbers = #tpu.dot_dimension_numbers<[1], [0], [0], [1], [0, 0, 1, 1], [], []>} : vector<26x28xbf16>, vector<28x130xbf16>, vector<26x130xf32> -> vector<26x130xf32>
    %15 = arith.addf %10, %14 : vector<26x130xf32>
    %16 = vector.extract_strided_slice %6 {offsets = [2, 0], sizes = [26, 28], strides = [1, 1]} : vector<28x28xf32> to vector<26x28xf32>
    %17 = arith.truncf %16 : vector<26x28xf32> to vector<26x28xbf16>
    %c64 = arith.constant 64 : index
    %c0_8 = arith.constant 0 : index
    %18 = vector.load %arg1[%c64, %c0_8] : memref<848x130xbf16, #tpu.memory_space<vmem>>, vector<28x130xbf16>
    %cst_9 = arith.constant dense<0.000000e+00> : vector<26x130xf32>
    %19 = tpu.matmul %17, %18, %cst_9 {dimension_numbers = #tpu.dot_dimension_numbers<[1], [0], [0], [1], [0, 0, 1, 1], [], []>} : vector<26x28xbf16>, vector<28x130xbf16>, vector<26x130xf32> -> vector<26x130xf32>
    %20 = arith.addf %15, %19 : vector<26x130xf32>
    %c0_10 = arith.constant 0 : index
    %c0_11 = arith.constant 0 : index
    %21 = vector.load %arg2[%c0_10, %c0_11] : memref<4x130xf32, #tpu.memory_space<vmem>>, vector<1x130xf32>
    %22 = vector.broadcast %21 : vector<1x130xf32> to vector<26x130xf32>
    %23 = arith.addf %20, %22 : vector<26x130xf32>
    %cst_12 = arith.constant 0.000000e+00 : f32
    %24 = vector.broadcast %cst_12 : f32 to vector<26x130xf32>
    %25 = arith.maximumf %23, %24 : vector<26x130xf32>
    %26 = vector.extract_strided_slice %25 {offsets = [0, 0], sizes = [25, 130], strides = [1, 1]} : vector<26x130xf32> to vector<25x130xf32>
    %27 = vector.extract_strided_slice %25 {offsets = [1, 0], sizes = [25, 130], strides = [1, 1]} : vector<26x130xf32> to vector<25x130xf32>
    %28 = arith.maximumf %26, %27 : vector<25x130xf32>
    %29 = vector.extract_strided_slice %28 {offsets = [0, 0], sizes = [25, 125], strides = [1, 1]} : vector<25x130xf32> to vector<25x125xf32>
    %30 = vector.extract_strided_slice %28 {offsets = [0, 5], sizes = [25, 125], strides = [1, 1]} : vector<25x130xf32> to vector<25x125xf32>
    %31 = arith.maximumf %29, %30 : vector<25x125xf32>
    %c96 = arith.constant 96 : index
    %c0_13 = arith.constant 0 : index
    %32 = vector.load %arg1[%c96, %c0_13] : memref<848x130xbf16, #tpu.memory_space<vmem>>, vector<13x25xbf16>
    %33 = arith.truncf %31 : vector<25x125xf32> to vector<25x125xbf16>
    %cst_14 = arith.constant dense<0.000000e+00> : vector<13x125xf32>
    %34 = tpu.matmul %32, %33, %cst_14 {dimension_numbers = #tpu.dot_dimension_numbers<[1], [0], [0], [1], [0, 0, 1, 1], [], []>} : vector<13x25xbf16>, vector<25x125xbf16>, vector<13x125xf32> -> vector<13x125xf32>
    %cst_15 = arith.constant 1.000000e+00 : f32
    %35 = vector.broadcast %cst_15 : f32 to vector<13x125xf32>
    %cst_16 = arith.constant 2.000000e-01 : f32
    %36 = vector.broadcast %cst_16 : f32 to vector<13x125xf32>
    %37 = arith.mulf %35, %36 : vector<13x125xf32>
    %38 = arith.addf %37, %34 : vector<13x125xf32>
    %39 = arith.subf %38, %34 : vector<13x125xf32>
    %40 = vector.extract_strided_slice %39 {offsets = [0, 0], sizes = [10, 125], strides = [1, 1]} : vector<13x125xf32> to vector<10x125xf32>
    %41 = arith.truncf %40 : vector<10x125xf32> to vector<10x125xbf16>
    %c112 = arith.constant 112 : index
    %c0_17 = arith.constant 0 : index
    %42 = vector.load %arg1[%c112, %c0_17] : memref<848x130xbf16, #tpu.memory_space<vmem>>, vector<125x60xbf16>
    %cst_18 = arith.constant dense<0.000000e+00> : vector<10x60xf32>
    %43 = tpu.matmul %41, %42, %cst_18 {dimension_numbers = #tpu.dot_dimension_numbers<[1], [0], [0], [1], [0, 0, 1, 1], [], []>} : vector<10x125xbf16>, vector<125x60xbf16>, vector<10x60xf32> -> vector<10x60xf32>
    %44 = vector.extract_strided_slice %39 {offsets = [1, 0], sizes = [10, 125], strides = [1, 1]} : vector<13x125xf32> to vector<10x125xf32>
    %45 = arith.truncf %44 : vector<10x125xf32> to vector<10x125xbf16>
    %c240 = arith.constant 240 : index
    %c0_19 = arith.constant 0 : index
    %46 = vector.load %arg1[%c240, %c0_19] : memref<848x130xbf16, #tpu.memory_space<vmem>>, vector<125x60xbf16>
    %cst_20 = arith.constant dense<0.000000e+00> : vector<10x60xf32>
    %47 = tpu.matmul %45, %46, %cst_20 {dimension_numbers = #tpu.dot_dimension_numbers<[1], [0], [0], [1], [0, 0, 1, 1], [], []>} : vector<10x125xbf16>, vector<125x60xbf16>, vector<10x60xf32> -> vector<10x60xf32>
    %48 = arith.addf %43, %47 : vector<10x60xf32>
    %49 = vector.extract_strided_slice %39 {offsets = [2, 0], sizes = [10, 125], strides = [1, 1]} : vector<13x125xf32> to vector<10x125xf32>
    %50 = arith.truncf %49 : vector<10x125xf32> to vector<10x125xbf16>
    %c368 = arith.constant 368 : index
    %c0_21 = arith.constant 0 : index
    %51 = vector.load %arg1[%c368, %c0_21] : memref<848x130xbf16, #tpu.memory_space<vmem>>, vector<125x60xbf16>
    %cst_22 = arith.constant dense<0.000000e+00> : vector<10x60xf32>
    %52 = tpu.matmul %50, %51, %cst_22 {dimension_numbers = #tpu.dot_dimension_numbers<[1], [0], [0], [1], [0, 0, 1, 1], [], []>} : vector<10x125xbf16>, vector<125x60xbf16>, vector<10x60xf32> -> vector<10x60xf32>
    %53 = arith.addf %48, %52 : vector<10x60xf32>
    %54 = vector.extract_strided_slice %39 {offsets = [3, 0], sizes = [10, 125], strides = [1, 1]} : vector<13x125xf32> to vector<10x125xf32>
    %55 = arith.truncf %54 : vector<10x125xf32> to vector<10x125xbf16>
    %c496 = arith.constant 496 : index
    %c0_23 = arith.constant 0 : index
    %56 = vector.load %arg1[%c496, %c0_23] : memref<848x130xbf16, #tpu.memory_space<vmem>>, vector<125x60xbf16>
    %cst_24 = arith.constant dense<0.000000e+00> : vector<10x60xf32>
    %57 = tpu.matmul %55, %56, %cst_24 {dimension_numbers = #tpu.dot_dimension_numbers<[1], [0], [0], [1], [0, 0, 1, 1], [], []>} : vector<10x125xbf16>, vector<125x60xbf16>, vector<10x60xf32> -> vector<10x60xf32>
    %58 = arith.addf %53, %57 : vector<10x60xf32>
    %c1 = arith.constant 1 : index
    %c0_25 = arith.constant 0 : index
    %59 = vector.load %arg2[%c1, %c0_25] : memref<4x130xf32, #tpu.memory_space<vmem>>, vector<1x60xf32>
    %60 = vector.broadcast %59 : vector<1x60xf32> to vector<10x60xf32>
    %61 = arith.addf %58, %60 : vector<10x60xf32>
    %cst_26 = arith.constant 0.000000e+00 : f32
    %62 = vector.broadcast %cst_26 : f32 to vector<10x60xf32>
    %63 = arith.maximumf %61, %62 : vector<10x60xf32>
    %64 = vector.extract_strided_slice %63 {offsets = [0, 0], sizes = [9, 60], strides = [1, 1]} : vector<10x60xf32> to vector<9x60xf32>
    %65 = vector.extract_strided_slice %63 {offsets = [1, 0], sizes = [9, 60], strides = [1, 1]} : vector<10x60xf32> to vector<9x60xf32>
    %66 = arith.maximumf %64, %65 : vector<9x60xf32>
    %67 = vector.extract_strided_slice %66 {offsets = [0, 0], sizes = [9, 54], strides = [1, 1]} : vector<9x60xf32> to vector<9x54xf32>
    %68 = vector.extract_strided_slice %66 {offsets = [0, 6], sizes = [9, 54], strides = [1, 1]} : vector<9x60xf32> to vector<9x54xf32>
    %69 = arith.maximumf %67, %68 : vector<9x54xf32>
    %c624 = arith.constant 624 : index
    %c0_27 = arith.constant 0 : index
    %70 = vector.load %arg1[%c624, %c0_27] : memref<848x130xbf16, #tpu.memory_space<vmem>>, vector<5x9xbf16>
    %71 = arith.truncf %69 : vector<9x54xf32> to vector<9x54xbf16>
    %cst_28 = arith.constant dense<0.000000e+00> : vector<5x54xf32>
    %72 = tpu.matmul %70, %71, %cst_28 {dimension_numbers = #tpu.dot_dimension_numbers<[1], [0], [0], [1], [0, 0, 1, 1], [], []>} : vector<5x9xbf16>, vector<9x54xbf16>, vector<5x54xf32> -> vector<5x54xf32>
    %cst_29 = arith.constant 1.000000e+00 : f32
    %73 = vector.broadcast %cst_29 : f32 to vector<5x54xf32>
    %cst_30 = arith.constant 3.000000e-01 : f32
    %74 = vector.broadcast %cst_30 : f32 to vector<5x54xf32>
    %75 = arith.mulf %73, %74 : vector<5x54xf32>
    %76 = arith.addf %75, %72 : vector<5x54xf32>
    %77 = arith.subf %76, %72 : vector<5x54xf32>
    %78 = vector.extract_strided_slice %77 {offsets = [0, 0], sizes = [3, 54], strides = [1, 1]} : vector<5x54xf32> to vector<3x54xf32>
    %79 = arith.truncf %78 : vector<3x54xf32> to vector<3x54xbf16>
    %c640 = arith.constant 640 : index
    %c0_31 = arith.constant 0 : index
    %80 = vector.load %arg1[%c640, %c0_31] : memref<848x130xbf16, #tpu.memory_space<vmem>>, vector<54x21xbf16>
    %cst_32 = arith.constant dense<0.000000e+00> : vector<3x21xf32>
    %81 = tpu.matmul %79, %80, %cst_32 {dimension_numbers = #tpu.dot_dimension_numbers<[1], [0], [0], [1], [0, 0, 1, 1], [], []>} : vector<3x54xbf16>, vector<54x21xbf16>, vector<3x21xf32> -> vector<3x21xf32>
    %82 = vector.extract_strided_slice %77 {offsets = [1, 0], sizes = [3, 54], strides = [1, 1]} : vector<5x54xf32> to vector<3x54xf32>
    %83 = arith.truncf %82 : vector<3x54xf32> to vector<3x54xbf16>
    %c704 = arith.constant 704 : index
    %c0_33 = arith.constant 0 : index
    %84 = vector.load %arg1[%c704, %c0_33] : memref<848x130xbf16, #tpu.memory_space<vmem>>, vector<54x21xbf16>
    %cst_34 = arith.constant dense<0.000000e+00> : vector<3x21xf32>
    %85 = tpu.matmul %83, %84, %cst_34 {dimension_numbers = #tpu.dot_dimension_numbers<[1], [0], [0], [1], [0, 0, 1, 1], [], []>} : vector<3x54xbf16>, vector<54x21xbf16>, vector<3x21xf32> -> vector<3x21xf32>
    %86 = arith.addf %81, %85 : vector<3x21xf32>
    %87 = vector.extract_strided_slice %77 {offsets = [2, 0], sizes = [3, 54], strides = [1, 1]} : vector<5x54xf32> to vector<3x54xf32>
    %88 = arith.truncf %87 : vector<3x54xf32> to vector<3x54xbf16>
    %c768 = arith.constant 768 : index
    %c0_35 = arith.constant 0 : index
    %89 = vector.load %arg1[%c768, %c0_35] : memref<848x130xbf16, #tpu.memory_space<vmem>>, vector<54x21xbf16>
    %cst_36 = arith.constant dense<0.000000e+00> : vector<3x21xf32>
    %90 = tpu.matmul %88, %89, %cst_36 {dimension_numbers = #tpu.dot_dimension_numbers<[1], [0], [0], [1], [0, 0, 1, 1], [], []>} : vector<3x54xbf16>, vector<54x21xbf16>, vector<3x21xf32> -> vector<3x21xf32>
    %91 = arith.addf %86, %90 : vector<3x21xf32>
    %c2 = arith.constant 2 : index
    %c0_37 = arith.constant 0 : index
    %92 = vector.load %arg2[%c2, %c0_37] : memref<4x130xf32, #tpu.memory_space<vmem>>, vector<1x21xf32>
    %93 = vector.broadcast %92 : vector<1x21xf32> to vector<3x21xf32>
    %94 = arith.addf %91, %93 : vector<3x21xf32>
    %cst_38 = arith.constant 0.000000e+00 : f32
    %95 = vector.broadcast %cst_38 : f32 to vector<3x21xf32>
    %96 = arith.maximumf %94, %95 : vector<3x21xf32>
    %97 = vector.extract_strided_slice %96 {offsets = [0, 0], sizes = [2, 21], strides = [1, 1]} : vector<3x21xf32> to vector<2x21xf32>
    %98 = vector.extract_strided_slice %96 {offsets = [1, 0], sizes = [2, 21], strides = [1, 1]} : vector<3x21xf32> to vector<2x21xf32>
    %99 = arith.maximumf %97, %98 : vector<2x21xf32>
    %100 = vector.extract_strided_slice %99 {offsets = [0, 0], sizes = [2, 14], strides = [1, 1]} : vector<2x21xf32> to vector<2x14xf32>
    %101 = vector.extract_strided_slice %99 {offsets = [0, 7], sizes = [2, 14], strides = [1, 1]} : vector<2x21xf32> to vector<2x14xf32>
    %102 = arith.maximumf %100, %101 : vector<2x14xf32>
    %103 = vector.extract_strided_slice %102 {offsets = [0, 0], sizes = [1, 14], strides = [1, 1]} : vector<2x14xf32> to vector<1x14xf32>
    %104 = arith.truncf %103 : vector<1x14xf32> to vector<1x14xbf16>
    %c832 = arith.constant 832 : index
    %c0_39 = arith.constant 0 : index
    %105 = vector.load %arg1[%c832, %c0_39] : memref<848x130xbf16, #tpu.memory_space<vmem>>, vector<14x10xbf16>
    %cst_40 = arith.constant dense<0.000000e+00> : vector<1x10xf32>
    %106 = tpu.matmul %104, %105, %cst_40 {dimension_numbers = #tpu.dot_dimension_numbers<[1], [0], [0], [1], [0, 0, 1, 1], [], []>} : vector<1x14xbf16>, vector<14x10xbf16>, vector<1x10xf32> -> vector<1x10xf32>
    %c3 = arith.constant 3 : index
    %c0_41 = arith.constant 0 : index
    %107 = vector.load %arg2[%c3, %c0_41] : memref<4x130xf32, #tpu.memory_space<vmem>>, vector<1x10xf32>
    %108 = arith.addf %106, %107 : vector<1x10xf32>
    %cst_42 = arith.constant dense<0xFF800000> : vector<1xf32>
    %109 = vector.multi_reduction <maximumf>, %108, %cst_42 [1] : vector<1x10xf32> to vector<1xf32>
    %110 = vector.shape_cast %109 : vector<1xf32> to vector<1x1xf32>
    %111 = vector.broadcast %110 : vector<1x1xf32> to vector<1x10xf32>
    %112 = arith.subf %108, %111 : vector<1x10xf32>
    %113 = math.exp %112 : vector<1x10xf32>
    %cst_43 = arith.constant dense<0.000000e+00> : vector<1xf32>
    %114 = vector.multi_reduction <add>, %113, %cst_43 [1] : vector<1x10xf32> to vector<1xf32>
    %115 = vector.shape_cast %114 : vector<1xf32> to vector<1x1xf32>
    %116 = math.log %115 : vector<1x1xf32>
    %117 = vector.broadcast %116 : vector<1x1xf32> to vector<1x10xf32>
    %118 = arith.subf %112, %117 : vector<1x10xf32>
    %cst_44 = arith.constant 0.000000e+00 : f32
    %119 = vector.broadcast %cst_44 : f32 to vector<2x10xf32>
    %120 = vector.broadcast %118 : vector<1x10xf32> to vector<2x10xf32>
    %121 = arith.addf %120, %119 : vector<2x10xf32>
    %c0_45 = arith.constant 0 : index
    %c0_46 = arith.constant 0 : index
    %122 = vector.load %arg3[%c0_45, %c0_46] : memref<2x10xf32, #tpu.memory_space<vmem>>, vector<2x10xf32>
    tpu.vector_store %arg3[%c0_45, %c0_46], %121 {strides = array<i32>} : memref<2x10xf32, #tpu.memory_space<vmem>>, vector<2x10xf32>,
    return
  }
}

</mosaic_0001>

<llo_original>
// kernel: convnet_forward.1
$region0: #{convnet_forward.1}
  #allocation0 [shape = 'u32[]', space=smem, size = 0x4, offset = 0x4, fixed_abs, tag = 'smem constant byte address 0x4 - core index']
  #allocation1 [shape = 'u32[72,128]{1,0:T(1,128)}', space=vmem, size = 0x9000, scoped, tag = 'internal scratch']
  %s0 = inlined_call_operand.vmem [shape: f32[2,28,28], index: 0, kind: input, shape index: {}]
  %s1 = inlined_call_operand.vmem [shape: bf16[848,130], index: 1, kind: input, shape index: {}]
  %s2 = inlined_call_operand.vmem [shape: f32[4,130], index: 2, kind: input, shape index: {}]
  %s3 = inlined_call_operand.hbm [shape: f32[2,10], index: 3, kind: output, shape index: {}]
  %s4 = sld [smem:[#allocation0]]
  $region22: #{convnet_forward.1} parent=0
    _
  %s6 = ssub.s32 1, %s4
  %s7 = scalar_select 0, %s6, %s4
  $region1: #{convnet_forward.1} parent=0
    #allocation2 [shape = 'u8[1024]{0}', space=vmem, size = 0x400, scoped, tag = 'output window, operand 0, single buffered']
    #allocation3 [shape = 's32[1]{0}', space=sflag, size = 0x4, scoped, tag = 'scoped memory for convnet_forward.1']
    %8 = vsyncpa [#allocation3], 0
    // Predicated region
    $region2: #{convnet_forward.1} parent=1 // pred_check
      _
    $region3: #{convnet_forward.1} parent=1 // pred_check_branch
      %10 = sbr.rel (0) target = $region5
    $region4: #{convnet_forward.1} parent=1 // pred_region
      _
    $region5: #{convnet_forward.1} parent=1 // pred_fallthru
      _
    // Predicated region
    $region6: #{convnet_forward.1} parent=1 // pred_check
      _
    $region7: #{convnet_forward.1} parent=1 // pred_check_branch
      %12 = sbr.rel (0) target = $region9
    $region8: #{convnet_forward.1} parent=1 // pred_region
      _
    $region9: #{convnet_forward.1} parent=1 // pred_fallthru
      _
    // Predicated region
    $region10: #{convnet_forward.1} parent=1 // pred_check
      _
    $region11: #{convnet_forward.1} parent=1 // pred_check_branch
      %14 = sbr.rel (0) target = $region13
    $region12: #{convnet_forward.1} parent=1 // pred_region
      _
    $region13: #{convnet_forward.1} parent=1 // pred_fallthru
      _
    %v16 = vld [vmem:[%s0] sm:$0xff]
    %v17 = vld [vmem:[%s0 + $0x8] sm:$0xff]
    %v18 = vld [vmem:[%s0 + $0x10] sm:$0xff]
    %v19 = vld [vmem:[%s0 + $0x18] sm:$0xf]
    %v20 = vadd.f32 %v16, 0.1
    %v21 = vadd.f32 %v17, 0.1
    %v22 = vadd.f32 %v18, 0.1
    %v23 = vadd.f32 %v19, 0.1
    %v24 = vsub.f32 %v20, %v16
    %v25 = vsub.f32 %v21, %v17
    %v26 = vsub.f32 %v22, %v18
    %v27 = vsub.f32 %v23, %v19
    %v28 = vpack.c.bf16 %v25, %v24
    %v29 = vpack.c.bf16 %v27, %v26
    %v30 = vld [vmem:[%s1] sm:$0xff]
    %v31 = vld [vmem:[%s1 + $0x8] sm:$0xff]
    %v32 = vld [vmem:[%s1 + $0x10] sm:$0xff]
    %v33 = vld [vmem:[%s1 + $0x18] sm:$0x33]
    %v34 = vld [vmem:[%s1 + $0x20] sm:$0xff]
    %v35 = vld [vmem:[%s1 + $0x28] sm:$0xff]
    %v36 = vld [vmem:[%s1 + $0x30] sm:$0xff]
    %v37 = vld [vmem:[%s1 + $0x38] sm:$0x33]
    %vm38 = vsmask.f32 7424
    %v40 = vshrl.u32 %v28, 16
    %v42 = vshll.u32 %v28, 16
    %v44 = vrot.slane %v42, 1
    %v45 = vor.u32 %v40, %v44
    %v47 = vshll.u32 %v29, 16
    %v49 = vrot.slane %v47, 1
    %v50 = vsel %vm38, %v45, %v49
    %v51 = vshrl.u32 %v29, 16
    %v53 = vor.u32 %v51, %v49
    %v58 = vunpack.c.l.b16 %v34
    %v59 = vunpack.c.h.b16 %v34
    %v60 = vunpack.c.l.b16 %v35
    %v61 = vunpack.c.h.b16 %v35
    %v62 = vunpack.c.l.b16 %v36
    %v63 = vunpack.c.h.b16 %v36
    %v64 = vunpack.c.l.b16 %v37
    %v65 = vunpack.c.h.b16 %v37
    %v66 = vpack.c.b16 %v60, %v58
    %v67 = vpack.c.b16 %v61, %v59
    %v68 = vpack.c.b16 %v64, %v62
    %v69 = vpack.c.b16 %v65, %v63
    %vm72 = vcmask 228352
    %v74 = vsel %vm72, %v50, 0
    %v77 = vsel %vm72, %v53, 0
    %vm79 = vcmask 1045504
    %v81 = vsel %vm79, %v68, 0
    %v84 = vsel %vm79, %v69, 0
    %86 = vmatpush.bf16.msra.mxu0 0
    %87 = vmatpush.bf16.msra.mxu0 0
    %88 = vmatpush.bf16.msra.mxu0 0
    %89 = vmatpush.bf16.msra.mxu0 0
    %90 = vmatpush.bf16.msra.mxu0 0
    %91 = vmatpush.bf16.msra.mxu0 0
    %92 = vmatpush.bf16.msra.mxu0 %v81
    %93 = vmatpush.bf16.msra.mxu0 %v66
    %94 = vmatmul.bf16.gmra.mxu0 %v74
    %v95 = vpop.f32.mrf.mxu0
    %v96 = vadd.f32 0.0, %v95
    %v97 = vpop.f32.mrf.mxu0
    %v98 = vadd.f32 0.0, %v97
    %99 = vmatmul.bf16.gmra.mxu0 %v77
    %v100 = vpop.f32.mrf.mxu0
    %v101 = vadd.f32 0.0, %v100
    %v102 = vpop.f32.mrf.mxu0
    %v103 = vadd.f32 0.0, %v102
    %104 = vdwg.mxu0
    %105 = vmatpush.bf16.msra.mxu0 0
    %106 = vmatpush.bf16.msra.mxu0 0
    %107 = vmatpush.bf16.msra.mxu0 0
    %108 = vmatpush.bf16.msra.mxu0 0
    %109 = vmatpush.bf16.msra.mxu0 0
    %110 = vmatpush.bf16.msra.mxu0 0
    %111 = vmatpush.bf16.msra.mxu0 %v84
    %112 = vmatpush.bf16.msra.mxu0 %v67
    %113 = vmatmul.bf16.gmra.mxu0 %v74
    %v114 = vpop.f32.mrf.mxu0
    %v115 = vadd.f32 0.0, %v114
    %v116 = vpop.f32.mrf.mxu0
    %v117 = vadd.f32 0.0, %v116
    %118 = vmatmul.bf16.gmra.mxu0 %v77
    %v119 = vpop.f32.mrf.mxu0
    %v120 = vadd.f32 0.0, %v119
    %v121 = vpop.f32.mrf.mxu0
    %v122 = vadd.f32 0.0, %v121
    %123 = vdwg.mxu0
    %v128 = vunpack.c.l.b16 %v30
    %v129 = vunpack.c.h.b16 %v30
    %v130 = vunpack.c.l.b16 %v31
    %v131 = vunpack.c.h.b16 %v31
    %v132 = vunpack.c.l.b16 %v32
    %v133 = vunpack.c.h.b16 %v32
    %v134 = vunpack.c.l.b16 %v33
    %v135 = vunpack.c.h.b16 %v33
    %v136 = vpack.c.b16 %v130, %v128
    %v137 = vpack.c.b16 %v131, %v129
    %v138 = vpack.c.b16 %v134, %v132
    %v139 = vpack.c.b16 %v135, %v133
    %v142 = vsel %vm72, %v28, 0
    %v144 = vsel %vm72, %v29, 0
    %v147 = vsel %vm79, %v138, 0
    %v150 = vsel %vm79, %v139, 0
    %152 = vmatpush.bf16.msra.mxu0 0
    %153 = vmatpush.bf16.msra.mxu0 0
    %154 = vmatpush.bf16.msra.mxu0 0
    %155 = vmatpush.bf16.msra.mxu0 0
    %156 = vmatpush.bf16.msra.mxu0 0
    %157 = vmatpush.bf16.msra.mxu0 0
    %158 = vmatpush.bf16.msra.mxu0 %v147
    %159 = vmatpush.bf16.msra.mxu0 %v136
    %160 = vmatmul.bf16.gmra.mxu0 %v142
    %v161 = vpop.f32.mrf.mxu0
    %v162 = vadd.f32 %v96, %v161
    %v163 = vpop.f32.mrf.mxu0
    %v164 = vadd.f32 %v98, %v163
    %165 = vmatmul.bf16.gmra.mxu0 %v144
    %v166 = vpop.f32.mrf.mxu0
    %v167 = vadd.f32 %v101, %v166
    %v168 = vpop.f32.mrf.mxu0
    %v169 = vadd.f32 %v103, %v168
    %170 = vdwg.mxu0
    %171 = vmatpush.bf16.msra.mxu0 0
    %172 = vmatpush.bf16.msra.mxu0 0
    %173 = vmatpush.bf16.msra.mxu0 0
    %174 = vmatpush.bf16.msra.mxu0 0
    %175 = vmatpush.bf16.msra.mxu0 0
    %176 = vmatpush.bf16.msra.mxu0 0
    %177 = vmatpush.bf16.msra.mxu0 %v150
    %178 = vmatpush.bf16.msra.mxu0 %v137
    %179 = vmatmul.bf16.gmra.mxu0 %v142
    %v180 = vpop.f32.mrf.mxu0
    %v181 = vadd.f32 %v115, %v180
    %v182 = vpop.f32.mrf.mxu0
    %v183 = vadd.f32 %v117, %v182
    %184 = vmatmul.bf16.gmra.mxu0 %v144
    %v185 = vpop.f32.mrf.mxu0
    %v186 = vadd.f32 %v120, %v185
    %v187 = vpop.f32.mrf.mxu0
    %v188 = vadd.f32 %v122, %v187
    %189 = vdwg.mxu0
    %v190 = vld [vmem:[%s1 + $0x40] sm:$0xff]
    %v191 = vld [vmem:[%s1 + $0x48] sm:$0xff]
    %v192 = vld [vmem:[%s1 + $0x50] sm:$0xff]
    %v193 = vld [vmem:[%s1 + $0x58] sm:$0x33]
    %vm196 = vcmask 1046528
    %v197 = vrot.slane %v28, 1
    %v198 = vrot.slane %v29, 1
    %v199 = vsel %vm196, %v197, %v198
    %v204 = vunpack.c.l.b16 %v190
    %v205 = vunpack.c.h.b16 %v190
    %v206 = vunpack.c.l.b16 %v191
    %v207 = vunpack.c.h.b16 %v191
    %v208 = vunpack.c.l.b16 %v192
    %v209 = vunpack.c.h.b16 %v192
    %v210 = vunpack.c.l.b16 %v193
    %v211 = vunpack.c.h.b16 %v193
    %v212 = vpack.c.b16 %v206, %v204
    %v213 = vpack.c.b16 %v207, %v205
    %v214 = vpack.c.b16 %v210, %v208
    %v215 = vpack.c.b16 %v211, %v209
    %v219 = vsel %vm72, %v199, 0
    %v222 = vsel %vm72, %v198, 0
    %v225 = vsel %vm79, %v214, 0
    %v228 = vsel %vm79, %v215, 0
    %230 = vmatpush.bf16.msra.mxu0 0
    %231 = vmatpush.bf16.msra.mxu0 0
    %232 = vmatpush.bf16.msra.mxu0 0
    %233 = vmatpush.bf16.msra.mxu0 0
    %234 = vmatpush.bf16.msra.mxu0 0
    %235 = vmatpush.bf16.msra.mxu0 0
    %236 = vmatpush.bf16.msra.mxu0 %v225
    %237 = vmatpush.bf16.msra.mxu0 %v212
    %238 = vmatmul.bf16.gmra.mxu0 %v219
    %v239 = vpop.f32.mrf.mxu0
    %v240 = vadd.f32 0.0, %v239
    %v241 = vpop.f32.mrf.mxu0
    %v242 = vadd.f32 0.0, %v241
    %243 = vmatmul.bf16.gmra.mxu0 %v222
    %v244 = vpop.f32.mrf.mxu0
    %v245 = vadd.f32 0.0, %v244
    %v246 = vpop.f32.mrf.mxu0
    %v247 = vadd.f32 0.0, %v246
    %248 = vdwg.mxu0
    %249 = vmatpush.bf16.msra.mxu0 0
    %250 = vmatpush.bf16.msra.mxu0 0
    %251 = vmatpush.bf16.msra.mxu0 0
    %252 = vmatpush.bf16.msra.mxu0 0
    %253 = vmatpush.bf16.msra.mxu0 0
    %254 = vmatpush.bf16.msra.mxu0 0
    %255 = vmatpush.bf16.msra.mxu0 %v228
    %256 = vmatpush.bf16.msra.mxu0 %v213
    %257 = vmatmul.bf16.gmra.mxu0 %v219
    %v258 = vpop.f32.mrf.mxu0
    %v259 = vadd.f32 0.0, %v258
    %v260 = vpop.f32.mrf.mxu0
    %v261 = vadd.f32 0.0, %v260
    %262 = vmatmul.bf16.gmra.mxu0 %v222
    %v263 = vpop.f32.mrf.mxu0
    %v264 = vadd.f32 0.0, %v263
    %v265 = vpop.f32.mrf.mxu0
    %v266 = vadd.f32 0.0, %v265
    %267 = vdwg.mxu0
    %v268 = vadd.f32 %v162, %v240
    %v269 = vadd.f32 %v181, %v259
    %v270 = vadd.f32 %v164, %v242
    %v271 = vadd.f32 %v183, %v261
    %v272 = vadd.f32 %v167, %v245
    %v273 = vadd.f32 %v186, %v264
    %v274 = vadd.f32 %v169, %v247
    %v275 = vadd.f32 %v188, %v266
    %v276 = vld [vmem:[%s2] ss:$4 sm:$0x3]
    %v278 = vperm.slane %v276, 0
    %v279 = vperm.slane %v276, 1
    %v282 = vadd.f32 %v268, %v278
    %v283 = vadd.f32 %v269, %v279
    %v284 = vadd.f32 %v270, %v278
    %v285 = vadd.f32 %v271, %v279
    %v286 = vadd.f32 %v272, %v278
    %v287 = vadd.f32 %v273, %v279
    %v288 = vadd.f32 %v274, %v278
    %v289 = vadd.f32 %v275, %v279
    %v290 = vmax.f32 %v282, 0.0
    %v291 = vmax.f32 %v283, 0.0
    %v292 = vmax.f32 %v284, 0.0
    %v293 = vmax.f32 %v285, 0.0
    %v294 = vmax.f32 %v286, 0.0
    %v295 = vmax.f32 %v287, 0.0
    %v296 = vmax.f32 %v288, 0.0
    %v297 = vmax.f32 %v289, 0.0
    %vm306 = vcmask 1046528
    %v307 = vrot.slane %v290, 1
    %v308 = vrot.slane %v292, 1
    %v309 = vsel %vm306, %v307, %v308
    %v310 = vrot.slane %v291, 1
    %v311 = vrot.slane %v293, 1
    %v312 = vsel %vm306, %v310, %v311
    %v313 = vrot.slane %v294, 1
    %v314 = vsel %vm306, %v308, %v313
    %v315 = vrot.slane %v295, 1
    %v316 = vsel %vm306, %v311, %v315
    %v317 = vrot.slane %v296, 1
    %v318 = vsel %vm306, %v313, %v317
    %v319 = vrot.slane %v297, 1
    %v320 = vsel %vm306, %v315, %v319
    %v329 = vmax.f32 %v290, %v309
    %v330 = vmax.f32 %v291, %v312
    %v331 = vmax.f32 %v292, %v314
    %v332 = vmax.f32 %v293, %v316
    %v333 = vmax.f32 %v294, %v318
    %v334 = vmax.f32 %v295, %v320
    %v335 = vmax.f32 %v296, %v317
    %v336 = vmax.f32 %v297, %v319
    %345 = vrot.lane.b32.xlu0 %v329, 123
    %v346 = vpop.permute.xlu0 %345
    %347 = vrot.lane.b32.xlu0 %v330, 123
    %v348 = vpop.permute.xlu0 %347
    %349 = vrot.lane.b32.xlu0 %v331, 123
    %v350 = vpop.permute.xlu0 %349
    %351 = vrot.lane.b32.xlu0 %v332, 123
    %v352 = vpop.permute.xlu0 %351
    %353 = vrot.lane.b32.xlu0 %v333, 123
    %v354 = vpop.permute.xlu0 %353
    %355 = vrot.lane.b32.xlu0 %v334, 123
    %v356 = vpop.permute.xlu0 %355
    %357 = vrot.lane.b32.xlu0 %v335, 123
    %v358 = vpop.permute.xlu0 %357
    %359 = vrot.lane.b32.xlu0 %v336, 123
    %v360 = vpop.permute.xlu0 %359
    %vm361 = vcmask 1006592
    %v362 = vsel %vm361, %v346, %v348
    %v363 = vsel %vm361, %v350, %v352
    %v364 = vsel %vm361, %v354, %v356
    %v365 = vsel %vm361, %v358, %v360
    %v370 = vmax.f32 %v329, %v362
    %v371 = vmax.f32 %v331, %v363
    %v372 = vmax.f32 %v333, %v364
    %v373 = vmax.f32 %v335, %v365
    %v374 = vld [vmem:[%s1 + $0x60] sm:$0xf]
    %v375 = vld [vmem:[%s1 + $0x68] sm:$0x7]
    %v376 = vpack.c.bf16 %v371, %v370
    %v377 = vpack.c.bf16 %v373, %v372
    %v380 = vunpack.c.l.b16 %v374
    %v381 = vunpack.c.l.b16 %v375
    %v382 = vpack.c.b16 %v381, %v380
    %vm383 = vcmask 203776
    %v385 = vsel %vm383, %v382, 0
    %vm387 = vcmask 1043456
    %vm388 = vcmask 1044480
    %v389 = vsel %vm387, 4294967295, 65535
    %v390 = vsel %vm388, %v389, 0
    %v392 = vand.u32 %v377, %v390
    %394 = vmatpush.bf16.msra.mxu0 0
    %395 = vmatpush.bf16.msra.mxu0 0
    %396 = vmatpush.bf16.msra.mxu0 0
    %397 = vmatpush.bf16.msra.mxu0 0
    %398 = vmatpush.bf16.msra.mxu0 0
    %399 = vmatpush.bf16.msra.mxu0 0
    %400 = vmatpush.bf16.msra.mxu0 %v392
    %401 = vmatpush.bf16.msra.mxu0 %v376
    %402 = vmatmul.bf16.gmra.mxu0 %v385
    %v403 = vpop.f32.mrf.mxu0
    %v404 = vadd.f32 0.0, %v403
    %v405 = vpop.f32.mrf.mxu0
    %v406 = vadd.f32 0.0, %v405
    %407 = vdwg.mxu0
    %v408 = vadd.f32 %v404, 0.2
    %v409 = vadd.f32 %v406, 0.2
    %v410 = vsub.f32 %v408, %v404
    %v411 = vsub.f32 %v409, %v406
    %v412 = vpack.c.bf16 %v411, %v410
    %v413 = vld [vmem:[%s1 + $0x70] sm:$0xf]
    %v414 = vld [vmem:[%s1 + $0x78] sm:$0xf]
    %v415 = vld [vmem:[%s1 + $0x80] sm:$0xf]
    %v416 = vld [vmem:[%s1 + $0x88] sm:$0xf]
    %v417 = vld [vmem:[%s1 + $0x90] sm:$0xf]
    %v418 = vld [vmem:[%s1 + $0x98] sm:$0xf]
    %v419 = vld [vmem:[%s1 + $0xa0] sm:$0xf]
    %v420 = vld [vmem:[%s1 + $0xa8] sm:$0xf]
    %v421 = vld [vmem:[%s1 + $0xb0] sm:$0xf]
    %v422 = vld [vmem:[%s1 + $0xb8] sm:$0xf]
    %v423 = vld [vmem:[%s1 + $0xc0] sm:$0xf]
    %v424 = vld [vmem:[%s1 + $0xc8] sm:$0xf]
    %v425 = vld [vmem:[%s1 + $0xd0] sm:$0xf]
    %v426 = vld [vmem:[%s1 + $0xd8] sm:$0xf]
    %v427 = vld [vmem:[%s1 + $0xe0] sm:$0xf]
    %v428 = vld [vmem:[%s1 + $0xe8] sm:$0x7]
    %v429 = vld [vmem:[%s1 + $0xf0] sm:$0xf]
    %v430 = vld [vmem:[%s1 + $0xf8] sm:$0xf]
    %v431 = vld [vmem:[%s1 + $0x100] sm:$0xf]
    %v432 = vld [vmem:[%s1 + $0x108] sm:$0xf]
    %v433 = vld [vmem:[%s1 + $0x110] sm:$0xf]
    %v434 = vld [vmem:[%s1 + $0x118] sm:$0xf]
    %v435 = vld [vmem:[%s1 + $0x120] sm:$0xf]
    %v436 = vld [vmem:[%s1 + $0x128] sm:$0xf]
    %v437 = vld [vmem:[%s1 + $0x130] sm:$0xf]
    %v438 = vld [vmem:[%s1 + $0x138] sm:$0xf]
    %v439 = vld [vmem:[%s1 + $0x140] sm:$0xf]
    %v440 = vld [vmem:[%s1 + $0x148] sm:$0xf]
    %v441 = vld [vmem:[%s1 + $0x150] sm:$0xf]
    %v442 = vld [vmem:[%s1 + $0x158] sm:$0xf]
    %v443 = vld [vmem:[%s1 + $0x160] sm:$0xf]
    %v444 = vld [vmem:[%s1 + $0x168] sm:$0x7]
    %v446 = vshrl.u32 %v412, 16
    %v448 = vshll.u32 %v412, 16
    %v450 = vrot.slane %v448, 1
    %v451 = vor.u32 %v446, %v450
    %v468 = vunpack.c.l.b16 %v429
    %v469 = vunpack.c.l.b16 %v430
    %v470 = vunpack.c.l.b16 %v431
    %v471 = vunpack.c.l.b16 %v432
    %v472 = vunpack.c.l.b16 %v433
    %v473 = vunpack.c.l.b16 %v434
    %v474 = vunpack.c.l.b16 %v435
    %v475 = vunpack.c.l.b16 %v436
    %v476 = vunpack.c.l.b16 %v437
    %v477 = vunpack.c.l.b16 %v438
    %v478 = vunpack.c.l.b16 %v439
    %v479 = vunpack.c.l.b16 %v440
    %v480 = vunpack.c.l.b16 %v441
    %v481 = vunpack.c.l.b16 %v442
    %v482 = vunpack.c.l.b16 %v443
    %v483 = vunpack.c.l.b16 %v444
    %v484 = vpack.c.b16 %v469, %v468
    %v485 = vpack.c.b16 %v471, %v470
    %v486 = vpack.c.b16 %v473, %v472
    %v487 = vpack.c.b16 %v475, %v474
    %v488 = vpack.c.b16 %v477, %v476
    %v489 = vpack.c.b16 %v479, %v478
    %v490 = vpack.c.b16 %v481, %v480
    %v491 = vpack.c.b16 %v483, %v482
    %vm499 = vcmask 1022976
    %v501 = vsel %vm499, %v451, 0
    %v503 = vsel %vm79, 4294967295, 65535
    %v504 = vsel %vm306, %v503, 0
    %v506 = vand.u32 %v491, %v504
    %508 = vmatpush.bf16.msra.mxu0 %v506
    %509 = vmatpush.bf16.msra.mxu0 %v490
    %510 = vmatpush.bf16.msra.mxu0 %v489
    %511 = vmatpush.bf16.msra.mxu0 %v488
    %512 = vmatpush.bf16.msra.mxu0 %v487
    %513 = vmatpush.bf16.msra.mxu0 %v486
    %514 = vmatpush.bf16.msra.mxu0 %v485
    %515 = vmatpush.bf16.msra.mxu0 %v484
    %516 = vmatmul.bf16.gmra.mxu0 %v501
    %v517 = vpop.f32.mrf.mxu0
    %v518 = vadd.f32 0.0, %v517
    %v519 = vpop.f32.mrf.mxu0
    %v520 = vadd.f32 0.0, %v519
    %521 = vdwg.mxu0
    %v538 = vunpack.c.l.b16 %v413
    %v539 = vunpack.c.l.b16 %v414
    %v540 = vunpack.c.l.b16 %v415
    %v541 = vunpack.c.l.b16 %v416
    %v542 = vunpack.c.l.b16 %v417
    %v543 = vunpack.c.l.b16 %v418
    %v544 = vunpack.c.l.b16 %v419
    %v545 = vunpack.c.l.b16 %v420
    %v546 = vunpack.c.l.b16 %v421
    %v547 = vunpack.c.l.b16 %v422
    %v548 = vunpack.c.l.b16 %v423
    %v549 = vunpack.c.l.b16 %v424
    %v550 = vunpack.c.l.b16 %v425
    %v551 = vunpack.c.l.b16 %v426
    %v552 = vunpack.c.l.b16 %v427
    %v553 = vunpack.c.l.b16 %v428
    %v554 = vpack.c.b16 %v539, %v538
    %v555 = vpack.c.b16 %v541, %v540
    %v556 = vpack.c.b16 %v543, %v542
    %v557 = vpack.c.b16 %v545, %v544
    %v558 = vpack.c.b16 %v547, %v546
    %v559 = vpack.c.b16 %v549, %v548
    %v560 = vpack.c.b16 %v551, %v550
    %v561 = vpack.c.b16 %v553, %v552
    %v569 = vsel %vm499, %v412, 0
    %v572 = vand.u32 %v561, %v504
    %574 = vmatpush.bf16.msra.mxu0 %v572
    %575 = vmatpush.bf16.msra.mxu0 %v560
    %576 = vmatpush.bf16.msra.mxu0 %v559
    %577 = vmatpush.bf16.msra.mxu0 %v558
    %578 = vmatpush.bf16.msra.mxu0 %v557
    %579 = vmatpush.bf16.msra.mxu0 %v556
    %580 = vmatpush.bf16.msra.mxu0 %v555
    %581 = vmatpush.bf16.msra.mxu0 %v554
    %582 = vmatmul.bf16.gmra.mxu0 %v569
    %v583 = vpop.f32.mrf.mxu0
    %v584 = vadd.f32 %v518, %v583
    %v585 = vpop.f32.mrf.mxu0
    %v586 = vadd.f32 %v520, %v585
    %587 = vdwg.mxu0
    %v588 = vld [vmem:[%s1 + $0x170] sm:$0xf]
    %v589 = vld [vmem:[%s1 + $0x178] sm:$0xf]
    %v590 = vld [vmem:[%s1 + $0x180] sm:$0xf]
    %v591 = vld [vmem:[%s1 + $0x188] sm:$0xf]
    %v592 = vld [vmem:[%s1 + $0x190] sm:$0xf]
    %v593 = vld [vmem:[%s1 + $0x198] sm:$0xf]
    %v594 = vld [vmem:[%s1 + $0x1a0] sm:$0xf]
    %v595 = vld [vmem:[%s1 + $0x1a8] sm:$0xf]
    %v596 = vld [vmem:[%s1 + $0x1b0] sm:$0xf]
    %v597 = vld [vmem:[%s1 + $0x1b8] sm:$0xf]
    %v598 = vld [vmem:[%s1 + $0x1c0] sm:$0xf]
    %v599 = vld [vmem:[%s1 + $0x1c8] sm:$0xf]
    %v600 = vld [vmem:[%s1 + $0x1d0] sm:$0xf]
    %v601 = vld [vmem:[%s1 + $0x1d8] sm:$0xf]
    %v602 = vld [vmem:[%s1 + $0x1e0] sm:$0xf]
    %v603 = vld [vmem:[%s1 + $0x1e8] sm:$0x7]
    %v605 = vrot.slane %v412, 1
    %v622 = vunpack.c.l.b16 %v588
    %v623 = vunpack.c.l.b16 %v589
    %v624 = vunpack.c.l.b16 %v590
    %v625 = vunpack.c.l.b16 %v591
    %v626 = vunpack.c.l.b16 %v592
    %v627 = vunpack.c.l.b16 %v593
    %v628 = vunpack.c.l.b16 %v594
    %v629 = vunpack.c.l.b16 %v595
    %v630 = vunpack.c.l.b16 %v596
    %v631 = vunpack.c.l.b16 %v597
    %v632 = vunpack.c.l.b16 %v598
    %v633 = vunpack.c.l.b16 %v599
    %v634 = vunpack.c.l.b16 %v600
    %v635 = vunpack.c.l.b16 %v601
    %v636 = vunpack.c.l.b16 %v602
    %v637 = vunpack.c.l.b16 %v603
    %v638 = vpack.c.b16 %v623, %v622
    %v639 = vpack.c.b16 %v625, %v624
    %v640 = vpack.c.b16 %v627, %v626
    %v641 = vpack.c.b16 %v629, %v628
    %v642 = vpack.c.b16 %v631, %v630
    %v643 = vpack.c.b16 %v633, %v632
    %v644 = vpack.c.b16 %v635, %v634
    %v645 = vpack.c.b16 %v637, %v636
    %v654 = vsel %vm499, %v605, 0
    %v657 = vand.u32 %v645, %v504
    %659 = vmatpush.bf16.msra.mxu0 %v657
    %660 = vmatpush.bf16.msra.mxu0 %v644
    %661 = vmatpush.bf16.msra.mxu0 %v643
    %662 = vmatpush.bf16.msra.mxu0 %v642
    %663 = vmatpush.bf16.msra.mxu0 %v641
    %664 = vmatpush.bf16.msra.mxu0 %v640
    %665 = vmatpush.bf16.msra.mxu0 %v639
    %666 = vmatpush.bf16.msra.mxu0 %v638
    %667 = vmatmul.bf16.gmra.mxu0 %v654
    %v668 = vpop.f32.mrf.mxu0
    %v669 = vadd.f32 0.0, %v668
    %v670 = vpop.f32.mrf.mxu0
    %v671 = vadd.f32 0.0, %v670
    %672 = vdwg.mxu0
    %v673 = vadd.f32 %v584, %v669
    %v674 = vadd.f32 %v586, %v671
    %v675 = vld [vmem:[%s1 + $0x1f0] sm:$0xf]
    %v676 = vld [vmem:[%s1 + $0x1f8] sm:$0xf]
    %v677 = vld [vmem:[%s1 + $0x200] sm:$0xf]
    %v678 = vld [vmem:[%s1 + $0x208] sm:$0xf]
    %v679 = vld [vmem:[%s1 + $0x210] sm:$0xf]
    %v680 = vld [vmem:[%s1 + $0x218] sm:$0xf]
    %v681 = vld [vmem:[%s1 + $0x220] sm:$0xf]
    %v682 = vld [vmem:[%s1 + $0x228] sm:$0xf]
    %v683 = vld [vmem:[%s1 + $0x230] sm:$0xf]
    %v684 = vld [vmem:[%s1 + $0x238] sm:$0xf]
    %v685 = vld [vmem:[%s1 + $0x240] sm:$0xf]
    %v686 = vld [vmem:[%s1 + $0x248] sm:$0xf]
    %v687 = vld [vmem:[%s1 + $0x250] sm:$0xf]
    %v688 = vld [vmem:[%s1 + $0x258] sm:$0xf]
    %v689 = vld [vmem:[%s1 + $0x260] sm:$0xf]
    %v690 = vld [vmem:[%s1 + $0x268] sm:$0x7]
    %v691 = vrot.slane %v446, 1
    %v692 = vrot.slane %v448, 2
    %v693 = vor.u32 %v691, %v692
    %v710 = vunpack.c.l.b16 %v675
    %v711 = vunpack.c.l.b16 %v676
    %v712 = vunpack.c.l.b16 %v677
    %v713 = vunpack.c.l.b16 %v678
    %v714 = vunpack.c.l.b16 %v679
    %v715 = vunpack.c.l.b16 %v680
    %v716 = vunpack.c.l.b16 %v681
    %v717 = vunpack.c.l.b16 %v682
    %v718 = vunpack.c.l.b16 %v683
    %v719 = vunpack.c.l.b16 %v684
    %v720 = vunpack.c.l.b16 %v685
    %v721 = vunpack.c.l.b16 %v686
    %v722 = vunpack.c.l.b16 %v687
    %v723 = vunpack.c.l.b16 %v688
    %v724 = vunpack.c.l.b16 %v689
    %v725 = vunpack.c.l.b16 %v690
    %v726 = vpack.c.b16 %v711, %v710
    %v727 = vpack.c.b16 %v713, %v712
    %v728 = vpack.c.b16 %v715, %v714
    %v729 = vpack.c.b16 %v717, %v716
    %v730 = vpack.c.b16 %v719, %v718
    %v731 = vpack.c.b16 %v721, %v720
    %v732 = vpack.c.b16 %v723, %v722
    %v733 = vpack.c.b16 %v725, %v724
    %v742 = vsel %vm499, %v693, 0
    %v745 = vand.u32 %v733, %v504
    %747 = vmatpush.bf16.msra.mxu0 %v745
    %748 = vmatpush.bf16.msra.mxu0 %v732
    %749 = vmatpush.bf16.msra.mxu0 %v731
    %750 = vmatpush.bf16.msra.mxu0 %v730
    %751 = vmatpush.bf16.msra.mxu0 %v729
    %752 = vmatpush.bf16.msra.mxu0 %v728
    %753 = vmatpush.bf16.msra.mxu0 %v727
    %754 = vmatpush.bf16.msra.mxu0 %v726
    %755 = vmatmul.bf16.gmra.mxu0 %v742
    %v756 = vpop.f32.mrf.mxu0
    %v757 = vadd.f32 0.0, %v756
    %v758 = vpop.f32.mrf.mxu0
    %v759 = vadd.f32 0.0, %v758
    %760 = vdwg.mxu0
    %v761 = vadd.f32 %v673, %v757
    %v762 = vadd.f32 %v674, %v759
    %v763 = vld [vmem:[%s2 + $0x1] sm:$0x1]
    %v764 = vperm.slane %v763, 0
    %v765 = vadd.f32 %v761, %v764
    %v766 = vadd.f32 %v762, %v764
    %v767 = vmax.f32 %v765, 0.0
    %v768 = vmax.f32 %v766, 0.0
    %v771 = vrot.slane %v767, 1
    %v772 = vrot.slane %v768, 1
    %v773 = vsel %vm306, %v771, %v772
    %v776 = vmax.f32 %v767, %v773
    %v777 = vmax.f32 %v768, %v772
    %780 = vrot.lane.b32.xlu0 %v776, 122
    %v781 = vpop.permute.xlu0 %780
    %782 = vrot.lane.b32.xlu0 %v777, 122
    %v783 = vpop.permute.xlu0 %782
    %v786 = vmax.f32 %v776, %v781
    %v787 = vmax.f32 %v777, %v783
    %v788 = vld [vmem:[%s1 + $0x270] sm:$0x7]
    %v789 = vpack.c.bf16 %v787, %v786
    %vm790 = vcmask 72704
    %v792 = vsel %vm790, %v788, 0
    %v795 = vand.u32 %v789, %v390
    %797 = vmatpush.bf16.msra.mxu0 0
    %798 = vmatpush.bf16.msra.mxu0 0
    %799 = vmatpush.bf16.msra.mxu0 0
    %800 = vmatpush.bf16.msra.mxu0 0
    %801 = vmatpush.bf16.msra.mxu0 0
    %802 = vmatpush.bf16.msra.mxu0 0
    %803 = vmatpush.bf16.msra.mxu0 0
    %804 = vmatpush.bf16.msra.mxu0 %v795
    %805 = vmatmul.bf16.gmra.mxu0 %v792
    %v806 = vpop.f32.mrf.mxu0
    %v807 = vadd.f32 0.0, %v806
    %v808 = vpop.f32.mrf.mxu0
    %809 = vdwg.mxu0
    %v810 = vadd.f32 %v807, 0.3
    %v811 = vsub.f32 %v810, %v807
    %v812 = vpack.c.bf16 %v811, %v811
    %v813 = vld [vmem:[%s1 + $0x280] sm:$0xf]
    %v814 = vld [vmem:[%s1 + $0x288] sm:$0xf]
    %v815 = vld [vmem:[%s1 + $0x290] sm:$0xf]
    %v816 = vld [vmem:[%s1 + $0x298] sm:$0xf]
    %v817 = vld [vmem:[%s1 + $0x2a0] sm:$0xf]
    %v818 = vld [vmem:[%s1 + $0x2a8] sm:$0xf]
    %v819 = vld [vmem:[%s1 + $0x2b0] sm:$0x7]
    %v820 = vld [vmem:[%s1 + $0x2c0] sm:$0xf]
    %v821 = vld [vmem:[%s1 + $0x2c8] sm:$0xf]
    %v822 = vld [vmem:[%s1 + $0x2d0] sm:$0xf]
    %v823 = vld [vmem:[%s1 + $0x2d8] sm:$0xf]
    %v824 = vld [vmem:[%s1 + $0x2e0] sm:$0xf]
    %v825 = vld [vmem:[%s1 + $0x2e8] sm:$0xf]
    %v826 = vld [vmem:[%s1 + $0x2f0] sm:$0x7]
    %v828 = vshrl.u32 %v812, 16
    %v830 = vshll.u32 %v812, 16
    %v832 = vrot.slane %v830, 1
    %v833 = vor.u32 %v828, %v832
    %v841 = vunpack.c.l.b16 %v820
    %v842 = vunpack.c.l.b16 %v821
    %v843 = vunpack.c.l.b16 %v822
    %v844 = vunpack.c.l.b16 %v823
    %v845 = vunpack.c.l.b16 %v824
    %v846 = vunpack.c.l.b16 %v825
    %v847 = vunpack.c.l.b16 %v826
    %v848 = vpack.c.b16 %v842, %v841
    %v849 = vpack.c.b16 %v844, %v843
    %v850 = vpack.c.b16 %v846, %v845
    %v851 = vpack.c.b16 %v847, %v847
    %vm855 = vcmask 441344
    %v857 = vsel %vm855, %v833, 0
    %vm859 = vcmask 1042432
    %v861 = vsel %vm859, %v851, 0
    %863 = vmatpush.bf16.msra.mxu0 0
    %864 = vmatpush.bf16.msra.mxu0 0
    %865 = vmatpush.bf16.msra.mxu0 0
    %866 = vmatpush.bf16.msra.mxu0 0
    %867 = vmatpush.bf16.msra.mxu0 %v861
    %868 = vmatpush.bf16.msra.mxu0 %v850
    %869 = vmatpush.bf16.msra.mxu0 %v849
    %870 = vmatpush.bf16.msra.mxu0 %v848
    %871 = vmatmul.bf16.gmra.mxu0 %v857
    %v872 = vpop.f32.mrf.mxu0
    %v873 = vadd.f32 0.0, %v872
    %v874 = vpop.f32.mrf.mxu0
    %875 = vdwg.mxu0
    %v883 = vunpack.c.l.b16 %v813
    %v884 = vunpack.c.l.b16 %v814
    %v885 = vunpack.c.l.b16 %v815
    %v886 = vunpack.c.l.b16 %v816
    %v887 = vunpack.c.l.b16 %v817
    %v888 = vunpack.c.l.b16 %v818
    %v889 = vunpack.c.l.b16 %v819
    %v890 = vpack.c.b16 %v884, %v883
    %v891 = vpack.c.b16 %v886, %v885
    %v892 = vpack.c.b16 %v888, %v887
    %v893 = vpack.c.b16 %v889, %v889
    %v897 = vsel %vm855, %v812, 0
    %v900 = vsel %vm859, %v893, 0
    %902 = vmatpush.bf16.msra.mxu0 0
    %903 = vmatpush.bf16.msra.mxu0 0
    %904 = vmatpush.bf16.msra.mxu0 0
    %905 = vmatpush.bf16.msra.mxu0 0
    %906 = vmatpush.bf16.msra.mxu0 %v900
    %907 = vmatpush.bf16.msra.mxu0 %v892
    %908 = vmatpush.bf16.msra.mxu0 %v891
    %909 = vmatpush.bf16.msra.mxu0 %v890
    %910 = vmatmul.bf16.gmra.mxu0 %v897
    %v911 = vpop.f32.mrf.mxu0
    %v912 = vadd.f32 %v873, %v911
    %v913 = vpop.f32.mrf.mxu0
    %914 = vdwg.mxu0
    %v915 = vld [vmem:[%s1 + $0x300] sm:$0xf]
    %v916 = vld [vmem:[%s1 + $0x308] sm:$0xf]
    %v917 = vld [vmem:[%s1 + $0x310] sm:$0xf]
    %v918 = vld [vmem:[%s1 + $0x318] sm:$0xf]
    %v919 = vld [vmem:[%s1 + $0x320] sm:$0xf]
    %v920 = vld [vmem:[%s1 + $0x328] sm:$0xf]
    %v921 = vld [vmem:[%s1 + $0x330] sm:$0x7]
    %v923 = vrot.slane %v812, 1
    %v931 = vunpack.c.l.b16 %v915
    %v932 = vunpack.c.l.b16 %v916
    %v933 = vunpack.c.l.b16 %v917
    %v934 = vunpack.c.l.b16 %v918
    %v935 = vunpack.c.l.b16 %v919
    %v936 = vunpack.c.l.b16 %v920
    %v937 = vunpack.c.l.b16 %v921
    %v938 = vpack.c.b16 %v932, %v931
    %v939 = vpack.c.b16 %v934, %v933
    %v940 = vpack.c.b16 %v936, %v935
    %v941 = vpack.c.b16 %v937, %v937
    %v946 = vsel %vm855, %v923, 0
    %v949 = vsel %vm859, %v941, 0
    %951 = vmatpush.bf16.msra.mxu0 0
    %952 = vmatpush.bf16.msra.mxu0 0
    %953 = vmatpush.bf16.msra.mxu0 0
    %954 = vmatpush.bf16.msra.mxu0 0
    %955 = vmatpush.bf16.msra.mxu0 %v949
    %956 = vmatpush.bf16.msra.mxu0 %v940
    %957 = vmatpush.bf16.msra.mxu0 %v939
    %958 = vmatpush.bf16.msra.mxu0 %v938
    %959 = vmatmul.bf16.gmra.mxu0 %v946
    %v960 = vpop.f32.mrf.mxu0
    %v961 = vadd.f32 0.0, %v960
    %v962 = vpop.f32.mrf.mxu0
    %963 = vdwg.mxu0
    %v964 = vadd.f32 %v912, %v961
    %v965 = vld [vmem:[%s2 + $0x2] sm:$0x1]
    %v966 = vperm.slane %v965, 0
    %v967 = vadd.f32 %v964, %v966
    %v968 = vmax.f32 %v967, 0.0
    %v970 = vrot.slane %v968, 1
    %v972 = vmax.f32 %v968, %v970
    %974 = vrot.lane.b32.xlu0 %v972, 121
    %v975 = vpop.permute.xlu0 %974
    %v977 = vmax.f32 %v972, %v975
    %v978 = vpack.c.bf16 %v977, %v977
    %v979 = vld [vmem:[%s1 + $0x340] sm:$0xf]
    %v980 = vld [vmem:[%s1 + $0x348] sm:$0x7]
    %v981 = vld [vmem:[%s2 + $0x3] sm:$0x1]
    %v984 = vunpack.c.l.b16 %v979
    %v985 = vunpack.c.l.b16 %v980
    %v986 = vpack.c.b16 %v985, %v984
    %vm987 = vcmask 113664
    %v989 = vsel %vm987, %v978, 0
    %v992 = vsel %vm306, %v986, 0
    %994 = vmatpush.bf16.msra.mxu0 0
    %995 = vmatpush.bf16.msra.mxu0 0
    %996 = vmatpush.bf16.msra.mxu0 0
    %997 = vmatpush.bf16.msra.mxu0 0
    %998 = vmatpush.bf16.msra.mxu0 0
    %999 = vmatpush.bf16.msra.mxu0 0
    %1000 = vmatpush.bf16.msra.mxu0 0
    %1001 = vmatpush.bf16.msra.mxu0 %v992
    %1002 = vmatmul.bf16.gmra.mxu0 %v989
    %v1003 = vpop.f32.mrf.mxu0
    %v1004 = vadd.f32 %v981, %v1003
    %v1005 = vpop.f32.mrf.mxu0
    %1006 = vdwg.mxu0
    %vm1007 = vcmask 73728
    %v1008 = vsel %vm1007, %v1004, -inf
    %1009 = vmax.xlane.f32.xlu0 %v1008
    %v1010 = vpop.xlane.xlu0 %1009
    %v1011 = vsub.f32 %v1004, %v1010
    %v1012 = vmul.f32 %v1011, 1.442695
    %v1013 = vpow.pop %v1012
    %v1014 = vsel %vm1007, %v1013, 0.0
    %1015 = vadd.xlane.f32.xlu0 %v1014
    %v1016 = vpop.xlane.xlu0 %1015
    %v1017 = vlog2.pop %v1016
    %v1018 = vmul.f32 %v1017, 0.6931472
    %v1019 = vsub.f32 %v1011, %v1018
    %v1020 = vperm.slane %v1019, 0
    %v1021 = vadd.f32 %v1020, 0.0
    %vm1022 = vcmask 74752
    %1023 = vst.msk [vmem:[#allocation2] sm:$0x3] %vm1022, %v1021
    // Predicated region
    $region14: #{convnet_forward.1} parent=1 // pred_check
      _
    $region15: #{convnet_forward.1} parent=1 // pred_check_branch
      %1025 = sbr.rel (0) target = $region17
    $region16: #{convnet_forward.1} parent=1 // pred_region
      %1027 = vsyncadd [#allocation3], 0
      %s1029 = sshll.u32 [#allocation2], 4
      %s1030 = int_to_ptr.vmem [resolvable:$true] %s1029
      %s1031 = sshll.u32 %s3, 4
      %s1032 = int_to_ptr.hbm [resolvable:$true] %s1031
      %1034 = dma.vmem_to_hbm [thread:$0]  %s1030, 32, %s1032, [#allocation3]
    $region17: #{convnet_forward.1} parent=1 // pred_fallthru
      _
    // Predicated region
    $region18: #{convnet_forward.1} parent=1 // pred_check
      _
    $region19: #{convnet_forward.1} parent=1 // pred_check_branch
      %1036 = sbr.rel (0) target = $region21
    $region20: #{convnet_forward.1} parent=1 // pred_region
      %1038 = dma.done [#allocation3], 32
    $region21: #{convnet_forward.1} parent=1 // pred_fallthru
      _
    %1039 = vsyncpa [#allocation3], 1

</llo_original>
